<compile_context>
chip_gen: v5e
topology: v5e:2x2
jax: 0.10.0
libtpu: 0.0.40
codegen_flags: <defaults>
</compile_context>

<pallas_src>
import functools
import math

import jax
import jax.numpy as jnp
from jax import lax
from jax.experimental import pallas as pl
from jax.experimental.pallas import tpu as pltpu

_LANES = 128
_PER_BUF_BYTES = 2 * 1024 * 1024    # f32-effective per-buffer tile budget (safe on v7x)
_MIN_STEP_BYTES = 1 * 1024 * 1024   # only split the grid if each step keeps >= this much data
_MAX_STEPS = 8                      # target steps for large inputs (v7x megacore + pipelining)
_VMEM_LIMIT = 48 * 1024 * 1024      # < v7x 64 MiB physical; ample headroom on v5e/v6e


def _round_up(a, b):
    return ((a + b - 1) // b) * b


# ---------------------------------------------------------------------------
# Kernels
# ---------------------------------------------------------------------------
def _probs_packed_kernel(x_ref, msum_ref, mbc_ref, o_ref, *, eps):
    # x_ref/o_ref: [tr, 128]; each physical row holds 128//d logical rows.
    # msum_ref: [128, g] 0/1 group-sum matrix; mbc_ref: [g, 128] 0/1 broadcast matrix.
    ax = jnp.abs(x_ref[...].astype(jnp.float32))
    # Per-group L1 sums on the MXU (exact: 0/1 weights, HIGHEST precision).
    s = lax.dot_general(
        ax, msum_ref[...], (((1,), (0,)), ((), ())),
        precision=lax.Precision.HIGHEST,
        preferred_element_type=jnp.float32,
    )                                                   # [tr, g]
    inv = 1.0 / jnp.maximum(s, eps)                     # exact reciprocal at narrow width
    # Broadcast each group's reciprocal back to its d lanes via the MXU (exact).
    inv_full = lax.dot_general(
        inv, mbc_ref[...], (((1,), (0,)), ((), ())),
        precision=lax.Precision.HIGHEST,
        preferred_element_type=jnp.float32,
    )                                                   # [tr, 128]
    o_ref[...] = (ax * inv_full).astype(o_ref.dtype)    # single VPU multiply per element


def _probs_rows_kernel(x_ref, o_ref, *, eps):
    # x_ref/o_ref: [tr, D] with D the lane-mapped normalization axis.
    ax = jnp.abs(x_ref[...].astype(jnp.float32))
    s = jnp.sum(ax, axis=-1, keepdims=True)             # [tr, 1]
    inv = 1.0 / jnp.maximum(s, eps)                     # narrow exact reciprocal per row
    o_ref[...] = (ax * inv).astype(o_ref.dtype)


def _l1_sums_kernel(x_ref, s_ref, *, d_total, td):
    # Pass 1 of the D-tiled path: accumulate per-row L1 sums over D tiles.
    k = pl.program_id(1)

    @pl.when(k == 0)
    def _():
        s_ref[...] = jnp.zeros_like(s_ref)

    ax = jnp.abs(x_ref[...].astype(jnp.float32))
    col = k * td + lax.broadcasted_iota(jnp.int32, ax.shape, 1)
    ax = jnp.where(col < d_total, ax, 0.0)              # mask the ragged last D block
    s_ref[...] += jnp.sum(ax, axis=-1, keepdims=True)


def _scale_kernel(x_ref, s_ref, o_ref, *, eps):
    # Pass 2 of the D-tiled path: scale |x| by the precomputed row reciprocal.
    ax = jnp.abs(x_ref[...].astype(jnp.float32))
    inv = 1.0 / jnp.maximum(s_ref[...], eps)            # [tr, 1]
    o_ref[...] = (ax * inv).astype(o_ref.dtype)


# ---------------------------------------------------------------------------
# Wrapper
# ---------------------------------------------------------------------------
def _pick_row_tile(r_phys, lane_w, row_align):
    """Row tile budgeted on the f32 working set, with a size-gated grid split."""
    tr_budget = max(row_align,
                    (_PER_BUF_BYTES // max(1, lane_w * 4)) // row_align * row_align)
    eff_bytes = r_phys * lane_w * 4
    target_steps = min(_MAX_STEPS, max(1, eff_bytes // _MIN_STEP_BYTES))
    tr_cap = _round_up(pl.cdiv(r_phys, target_steps), row_align)
    return max(row_align, min(tr_budget, tr_cap, _round_up(r_phys, row_align)))


def probs(x, *, eps=1e-12, _force_dtiled=False):
    """Equivalent of nlf.activations.Probs.forward."""
    orig_shape = x.shape
    d = orig_shape[-1]
    rows = math.prod(orig_shape[:-1])

    itemsize = jnp.dtype(x.dtype).itemsize
    row_align = 8 * max(1, 4 // itemsize)   # sublane packing: 8 f32 / 16 bf16 / 32 int8

    use_packed = (not _force_dtiled) and (d < _LANES) and (_LANES % d == 0)
    use_dtiled = _force_dtiled or ((not use_packed) and (d * 4 * row_align > _PER_BUF_BYTES))

    x2 = x.reshape(rows, d)

    if use_packed:
        # ---- lane-dense packed path --------------------------------------
        g = _LANES // d
        pad_rows = (-rows) % g
        if pad_rows:
            x2 = jnp.pad(x2, ((0, pad_rows), (0, 0)))   # keep full 128-lane density
        r_phys = (rows + pad_rows) // g
        xp = x2.reshape(r_phys, _LANES)

        tr = _pick_row_tile(r_phys, _LANES, row_align)
        grid = (pl.cdiv(r_phys, tr),)

        # 0/1 group matrices, built once; constant index_map keeps them VMEM-resident.
        group = jnp.arange(_LANES, dtype=jnp.int32) // d
        msum = (group[:, None] == jnp.arange(g, dtype=jnp.int32)[None, :]).astype(jnp.float32)
        mbc = msum.T

        outp = pl.pallas_call(
            functools.partial(_probs_packed_kernel, eps=eps),
            out_shape=jax.ShapeDtypeStruct((r_phys, _LANES), x.dtype),
            grid_spec=pltpu.PrefetchScalarGridSpec(
                num_scalar_prefetch=0,
                grid=grid,
                in_specs=[
                    pl.BlockSpec((tr, _LANES), lambda i: (i, 0)),
                    pl.BlockSpec((_LANES, g), lambda i: (0, 0)),
                    pl.BlockSpec((g, _LANES), lambda i: (0, 0)),
                ],
                out_specs=pl.BlockSpec((tr, _LANES), lambda i: (i, 0)),
            ),
            compiler_params=pltpu.CompilerParams(
                dimension_semantics=("parallel",),
                vmem_limit_bytes=_VMEM_LIMIT,
            ),
        )(xp, msum, mbc)

        out2 = outp.reshape(rows + pad_rows, d)
        if pad_rows:
            out2 = out2[:rows]
        return out2.reshape(orig_shape)

    if use_dtiled:
        # ---- two-pass D-tiled path (very large last dims) ----------------
        td = 2048 if d > 2048 else _round_up(d, _LANES)
        tr_budget = max(row_align, (_PER_BUF_BYTES // (td * 4)) // row_align * row_align)
        tr = max(row_align, min(tr_budget, _round_up(rows, row_align)))
        grid = (pl.cdiv(rows, tr), pl.cdiv(d, td))

        sums = pl.pallas_call(
            functools.partial(_l1_sums_kernel, d_total=d, td=td),
            out_shape=jax.ShapeDtypeStruct((rows, 1), jnp.float32),
            grid_spec=pltpu.PrefetchScalarGridSpec(
                num_scalar_prefetch=0,
                grid=grid,
                in_specs=[pl.BlockSpec((tr, td), lambda i, k: (i, k))],
                out_specs=pl.BlockSpec((tr, 1), lambda i, k: (i, 0)),
            ),
            compiler_params=pltpu.CompilerParams(
                dimension_semantics=("parallel", "arbitrary"),
                vmem_limit_bytes=_VMEM_LIMIT,
            ),
        )(x2)

        out2 = pl.pallas_call(
            functools.partial(_scale_kernel, eps=eps),
            out_shape=jax.ShapeDtypeStruct((rows, d), x.dtype),
            grid_spec=pltpu.PrefetchScalarGridSpec(
                num_scalar_prefetch=0,
                grid=grid,
                in_specs=[pl.BlockSpec((tr, td), lambda i, k: (i, k)),
                          pl.BlockSpec((tr, 1), lambda i, k: (i, 0))],
                out_specs=pl.BlockSpec((tr, td), lambda i, k: (i, k)),
            ),
            compiler_params=pltpu.CompilerParams(
                dimension_semantics=("parallel", "parallel"),
                vmem_limit_bytes=_VMEM_LIMIT,
            ),
        )(x2, sums)
        return out2.reshape(orig_shape)

    # ---- row-wise path (moderate D, D >= 128 or D not dividing 128) ------
    # TODO(synk): D < 128 not dividing 128 still stores at < 128-lane density;
    # a last-dim pad/repack would avoid the masked vst penalty at extra copy cost.
    tr = _pick_row_tile(rows, d, row_align)
    grid = (pl.cdiv(rows, tr),)
    out2 = pl.pallas_call(
        functools.partial(_probs_rows_kernel, eps=eps),
        out_shape=jax.ShapeDtypeStruct((rows, d), x.dtype),
        grid_spec=pltpu.PrefetchScalarGridSpec(
            num_scalar_prefetch=0,
            grid=grid,
            in_specs=[pl.BlockSpec((tr, d), lambda i: (i, 0))],
            out_specs=pl.BlockSpec((tr, d), lambda i: (i, 0)),
        ),
        compiler_params=pltpu.CompilerParams(
            dimension_semantics=("parallel",),
            vmem_limit_bytes=_VMEM_LIMIT,
        ),
    )(x2)
    return out2.reshape(orig_shape)


def _reference_probs(x, eps=1e-12):
    # Pure-JAX reference matching torch.nn.functional.normalize(abs(x), p=1, dim=-1).
    ax = jnp.abs(x.astype(jnp.float32))
    s = jnp.sum(ax, axis=-1, keepdims=True)
    return (ax / jnp.maximum(s, eps)).astype(x.dtype)


if __name__ == "__main__":
    key = jax.random.PRNGKey(0)

    # Case 1: small last dim (D=16), rows pack evenly -> lane-dense packed path.
    x = jax.random.normal(key, (2, 4, 16, 16), dtype=jnp.float32)
    y = jax.block_until_ready(probs(x))
    y_ref = _reference_probs(x)
    assert y.shape == x.shape
    assert jnp.allclose(y, y_ref, atol=1e-5, rtol=1e-5), "mismatch (packed path, D=16)"

    # Case 2: small last dim, rows do NOT pack evenly -> packed path with row padding.
    k2 = jax.random.fold_in(key, 1)
    xb = jax.random.normal(k2, (2, 5, 16), dtype=jnp.float32)
    yb = jax.block_until_ready(probs(xb))
    assert jnp.allclose(yb, _reference_probs(xb), atol=1e-5, rtol=1e-5), \
        "mismatch (packed path, padded rows)"

    # Case 3: lane-dense last dim (D=256) -> row-wise path.
    k3 = jax.random.fold_in(key, 2)
    x2 = jax.random.normal(k3, (2, 8, 256), dtype=jnp.float32)
    y2 = jax.block_until_ready(probs(x2))
    assert jnp.allclose(y2, _reference_probs(x2), atol=1e-5, rtol=1e-5), \
        "mismatch (row path, D=256)"

    # Case 4: force the two-pass D-tiled path (ragged last D block) to exercise it.
    k4 = jax.random.fold_in(key, 3)
    x3 = jax.random.normal(k4, (16, 4160), dtype=jnp.float32)
    y3 = jax.block_until_ready(probs(x3, _force_dtiled=True))
    assert jnp.allclose(y3, _reference_probs(x3), atol=1e-5, rtol=1e-5), \
        "mismatch (D-tiled path)"

    print("KERNEL_OK")
</pallas_src>

<mosaic_0001>
module attributes {stable_mosaic.version = 11 : i64} {
  func.func @_probs_packed_kernel(%arg0: i32, %arg1: memref<16x128xf32, #tpu.memory_space<vmem>>, %arg2: memref<128x8xf32, #tpu.memory_space<vmem>>, %arg3: memref<8x128xf32, #tpu.memory_space<vmem>>, %arg4: memref<16x128xf32, #tpu.memory_space<vmem>>) attributes {dimension_semantics = [#tpu.dimension_semantics<parallel>], iteration_bounds = array<i64: 1>, scalar_prefetch = 0 : i64, scratch_operands = 0 : i64, tpu.core_type = #tpu.core_type<tc>, window_params = [{transform_indices = @transform_0, window_bounds = array<i64: 16, 128>}, {pipeline_mode = #tpu.pipeline_mode<synchronous>, transform_indices = @transform_1, window_bounds = array<i64: 128, 8>}, {pipeline_mode = #tpu.pipeline_mode<synchronous>, transform_indices = @transform_2, window_bounds = array<i64: 8, 128>}, {transform_indices = @transform_3, window_bounds = array<i64: 16, 128>}]} {
    %c0 = arith.constant 0 : index
    %c0_0 = arith.constant 0 : index
    %0 = vector.load %arg1[%c0, %c0_0] : memref<16x128xf32, #tpu.memory_space<vmem>>, vector<16x128xf32>
    %1 = math.absf %0 : vector<16x128xf32>
    %c0_1 = arith.constant 0 : index
    %c0_2 = arith.constant 0 : index
    %2 = vector.load %arg2[%c0_1, %c0_2] : memref<128x8xf32, #tpu.memory_space<vmem>>, vector<128x8xf32>
    %cst = arith.constant dense<0.000000e+00> : vector<16x8xf32>
    %3 = tpu.matmul %1, %2, %cst {dimension_numbers = #tpu.dot_dimension_numbers<[1], [0], [0], [1], [0, 0, 1, 1], [], []>, precision = #tpu.contract_precision<fp32>} : vector<16x128xf32>, vector<128x8xf32>, vector<16x8xf32> -> vector<16x8xf32>
    %cst_3 = arith.constant 9.99999996E-13 : f32
    %4 = vector.broadcast %cst_3 : f32 to vector<16x8xf32>
    %5 = arith.maximumf %3, %4 : vector<16x8xf32>
    %cst_4 = arith.constant 1.000000e+00 : f32
    %6 = vector.broadcast %cst_4 : f32 to vector<16x8xf32>
    %7 = arith.divf %6, %5 : vector<16x8xf32>
    %c0_5 = arith.constant 0 : index
    %c0_6 = arith.constant 0 : index
    %8 = vector.load %arg3[%c0_5, %c0_6] : memref<8x128xf32, #tpu.memory_space<vmem>>, vector<8x128xf32>
    %cst_7 = arith.constant dense<0.000000e+00> : vector<16x128xf32>
    %9 = tpu.matmul %7, %8, %cst_7 {dimension_numbers = #tpu.dot_dimension_numbers<[1], [0], [0], [1], [0, 0, 1, 1], [], []>, precision = #tpu.contract_precision<fp32>} : vector<16x8xf32>, vector<8x128xf32>, vector<16x128xf32> -> vector<16x128xf32>
    %10 = arith.mulf %1, %9 : vector<16x128xf32>
    %c0_8 = arith.constant 0 : index
    %c0_9 = arith.constant 0 : index
    %11 = vector.load %arg4[%c0_8, %c0_9] : memref<16x128xf32, #tpu.memory_space<vmem>>, vector<16x128xf32>
    tpu.vector_store %arg4[%c0_8, %c0_9], %10 {strides = array<i32>} : memref<16x128xf32, #tpu.memory_space<vmem>>, vector<16x128xf32>,
    return
  }
  func.func @transform_0(%arg0: i32) -> (i32, i32) {
    %c0_i32 = arith.constant 0 : i32
    %c0_i32_0 = arith.constant 0 : i32
    return %arg0, %c0_i32 : i32, i32
  }
  func.func @transform_1(%arg0: i32) -> (i32, i32) {
    %c0_i32 = arith.constant 0 : i32
    %c0_i32_0 = arith.constant 0 : i32
    %c0_i32_1 = arith.constant 0 : i32
    return %c0_i32, %c0_i32_0 : i32, i32
  }
  func.func @transform_2(%arg0: i32) -> (i32, i32) {
    %c0_i32 = arith.constant 0 : i32
    %c0_i32_0 = arith.constant 0 : i32
    %c0_i32_1 = arith.constant 0 : i32
    return %c0_i32, %c0_i32_0 : i32, i32
  }
  func.func @transform_3(%arg0: i32) -> (i32, i32) {
    %c0_i32 = arith.constant 0 : i32
    %c0_i32_0 = arith.constant 0 : i32
    return %arg0, %c0_i32 : i32, i32
  }
}

</mosaic_0001>

<llo_original>
// kernel: tpu_custom_call.1
$region0: #{tpu_custom_call.1}
  #allocation0 [shape = 'u32[]', space=smem, size = 0x4, offset = 0x4, fixed_abs, tag = 'smem constant byte address 0x4 - core index']
  #allocation1 [shape = 'u32[72,128]{1,0:T(1,128)}', space=vmem, size = 0x9000, scoped, tag = 'internal scratch']
  %s0 = inlined_call_operand.vmem [shape: f32[16,128], index: 0, kind: input, shape index: {}]
  %s1 = inlined_call_operand.vmem [shape: f32[128,8], index: 1, kind: input, shape index: {}]
  %s2 = inlined_call_operand.vmem [shape: f32[8,128], index: 2, kind: input, shape index: {}]
  %s3 = inlined_call_operand.hbm [shape: f32[16,128], index: 3, kind: output, shape index: {}]
  %s4 = sld [smem:[#allocation0]]
  $region22: #{tpu_custom_call.1} parent=0
    _
  %s6 = ssub.s32 1, %s4
  %s7 = scalar_select 0, %s6, %s4
  $region1: #{tpu_custom_call.1} parent=0
    #allocation2 [shape = 'u8[8192]{0}', space=vmem, size = 0x2000, scoped, tag = 'output window, operand 0, single buffered']
    #allocation3 [shape = 's32[1]{0}', space=sflag, size = 0x4, scoped, tag = 'scoped memory for tpu_custom_call.1']
    %8 = vsyncpa [#allocation3], 0
    // Predicated region
    $region2: #{tpu_custom_call.1} parent=1 // pred_check
      _
    $region3: #{tpu_custom_call.1} parent=1 // pred_check_branch
      %10 = sbr.rel (0) target = $region5
    $region4: #{tpu_custom_call.1} parent=1 // pred_region
      _
    $region5: #{tpu_custom_call.1} parent=1 // pred_fallthru
      _
    // Predicated region
    $region6: #{tpu_custom_call.1} parent=1 // pred_check
      _
    $region7: #{tpu_custom_call.1} parent=1 // pred_check_branch
      %12 = sbr.rel (0) target = $region9
    $region8: #{tpu_custom_call.1} parent=1 // pred_region
      _
    $region9: #{tpu_custom_call.1} parent=1 // pred_fallthru
      _
    // Predicated region
    $region10: #{tpu_custom_call.1} parent=1 // pred_check
      _
    $region11: #{tpu_custom_call.1} parent=1 // pred_check_branch
      %14 = sbr.rel (0) target = $region13
    $region12: #{tpu_custom_call.1} parent=1 // pred_region
      _
    $region13: #{tpu_custom_call.1} parent=1 // pred_fallthru
      _
    %v15 = vld [vmem:[%s0] sm:$0xff]
    %v16 = vld [vmem:[%s0 + $0x8] sm:$0xff]
    %v17 = vand.u32 2147483647, %v15
    %v18 = vand.u32 2147483647, %v16
    %v19 = vld [vmem:[%s1] sm:$0xff]
    %v20 = vld [vmem:[%s1 + $0x8] sm:$0xff]
    %v21 = vld [vmem:[%s1 + $0x10] sm:$0xff]
    %v22 = vld [vmem:[%s1 + $0x18] sm:$0xff]
    %v23 = vld [vmem:[%s1 + $0x20] sm:$0xff]
    %v24 = vld [vmem:[%s1 + $0x28] sm:$0xff]
    %v25 = vld [vmem:[%s1 + $0x30] sm:$0xff]
    %v26 = vld [vmem:[%s1 + $0x38] sm:$0xff]
    %v27 = vld [vmem:[%s1 + $0x40] sm:$0xff]
    %v28 = vld [vmem:[%s1 + $0x48] sm:$0xff]
    %v29 = vld [vmem:[%s1 + $0x50] sm:$0xff]
    %v30 = vld [vmem:[%s1 + $0x58] sm:$0xff]
    %v31 = vld [vmem:[%s1 + $0x60] sm:$0xff]
    %v32 = vld [vmem:[%s1 + $0x68] sm:$0xff]
    %v33 = vld [vmem:[%s1 + $0x70] sm:$0xff]
    %v34 = vld [vmem:[%s1 + $0x78] sm:$0xff]
    %v35 = vand.u32 %v34, 4294901760
    %36 = vmatpush.msra.mxu0 %v35
    %v37 = vand.u32 %v33, 4294901760
    %38 = vmatpush.msra.mxu0 %v37
    %v39 = vand.u32 %v32, 4294901760
    %40 = vmatpush.msra.mxu0 %v39
    %v41 = vand.u32 %v31, 4294901760
    %42 = vmatpush.msra.mxu0 %v41
    %v43 = vand.u32 %v30, 4294901760
    %44 = vmatpush.msra.mxu0 %v43
    %v45 = vand.u32 %v29, 4294901760
    %46 = vmatpush.msra.mxu0 %v45
    %v47 = vand.u32 %v28, 4294901760
    %48 = vmatpush.msra.mxu0 %v47
    %v49 = vand.u32 %v27, 4294901760
    %50 = vmatpush.msra.mxu0 %v49
    %v51 = vand.u32 %v26, 4294901760
    %52 = vmatpush.msra.mxu0 %v51
    %v53 = vand.u32 %v25, 4294901760
    %54 = vmatpush.msra.mxu0 %v53
    %v55 = vand.u32 %v24, 4294901760
    %56 = vmatpush.msra.mxu0 %v55
    %v57 = vand.u32 %v23, 4294901760
    %58 = vmatpush.msra.mxu0 %v57
    %v59 = vand.u32 %v22, 4294901760
    %60 = vmatpush.msra.mxu0 %v59
    %v61 = vand.u32 %v21, 4294901760
    %62 = vmatpush.msra.mxu0 %v61
    %v63 = vand.u32 %v20, 4294901760
    %64 = vmatpush.msra.mxu0 %v63
    %v65 = vand.u32 %v19, 4294901760
    %66 = vmatpush.msra.mxu0 %v65
    %v67 = vand.u32 %v17, 4294901760
    %v68 = vsub.f32 %v17, %v67
    %v69 = vand.u32 %v68, 4294901760
    %v70 = vsub.f32 %v68, %v69
    %v71 = vand.u32 %v70, 4294901760
    %72 = vmatmul.f32.gmra.mxu0 %v71
    %v73 = vpop.f32.mrf.mxu0
    %v74 = vadd.f32 0.0, %v73
    %v75 = vand.u32 %v18, 4294901760
    %v76 = vsub.f32 %v18, %v75
    %v77 = vand.u32 %v76, 4294901760
    %v78 = vsub.f32 %v76, %v77
    %v79 = vand.u32 %v78, 4294901760
    %80 = vmatmul.f32.gmra.mxu0 %v79
    %v81 = vpop.f32.mrf.mxu0
    %v82 = vadd.f32 0.0, %v81
    %83 = vdwg.mxu0
    %v84 = vand.u32 %v34, 4294901760
    %v85 = vsub.f32 %v34, %v84
    %v86 = vand.u32 %v85, 4294901760
    %v87 = vsub.f32 %v85, %v86
    %v88 = vand.u32 %v87, 4294901760
    %89 = vmatpush.msra.mxu0 %v88
    %v90 = vand.u32 %v33, 4294901760
    %v91 = vsub.f32 %v33, %v90
    %v92 = vand.u32 %v91, 4294901760
    %v93 = vsub.f32 %v91, %v92
    %v94 = vand.u32 %v93, 4294901760
    %95 = vmatpush.msra.mxu0 %v94
    %v96 = vand.u32 %v32, 4294901760
    %v97 = vsub.f32 %v32, %v96
    %v98 = vand.u32 %v97, 4294901760
    %v99 = vsub.f32 %v97, %v98
    %v100 = vand.u32 %v99, 4294901760
    %101 = vmatpush.msra.mxu0 %v100
    %v102 = vand.u32 %v31, 4294901760
    %v103 = vsub.f32 %v31, %v102
    %v104 = vand.u32 %v103, 4294901760
    %v105 = vsub.f32 %v103, %v104
    %v106 = vand.u32 %v105, 4294901760
    %107 = vmatpush.msra.mxu0 %v106
    %v108 = vand.u32 %v30, 4294901760
    %v109 = vsub.f32 %v30, %v108
    %v110 = vand.u32 %v109, 4294901760
    %v111 = vsub.f32 %v109, %v110
    %v112 = vand.u32 %v111, 4294901760
    %113 = vmatpush.msra.mxu0 %v112
    %v114 = vand.u32 %v29, 4294901760
    %v115 = vsub.f32 %v29, %v114
    %v116 = vand.u32 %v115, 4294901760
    %v117 = vsub.f32 %v115, %v116
    %v118 = vand.u32 %v117, 4294901760
    %119 = vmatpush.msra.mxu0 %v118
    %v120 = vand.u32 %v28, 4294901760
    %v121 = vsub.f32 %v28, %v120
    %v122 = vand.u32 %v121, 4294901760
    %v123 = vsub.f32 %v121, %v122
    %v124 = vand.u32 %v123, 4294901760
    %125 = vmatpush.msra.mxu0 %v124
    %v126 = vand.u32 %v27, 4294901760
    %v127 = vsub.f32 %v27, %v126
    %v128 = vand.u32 %v127, 4294901760
    %v129 = vsub.f32 %v127, %v128
    %v130 = vand.u32 %v129, 4294901760
    %131 = vmatpush.msra.mxu0 %v130
    %v132 = vand.u32 %v26, 4294901760
    %v133 = vsub.f32 %v26, %v132
    %v134 = vand.u32 %v133, 4294901760
    %v135 = vsub.f32 %v133, %v134
    %v136 = vand.u32 %v135, 4294901760
    %137 = vmatpush.msra.mxu0 %v136
    %v138 = vand.u32 %v25, 4294901760
    %v139 = vsub.f32 %v25, %v138
    %v140 = vand.u32 %v139, 4294901760
    %v141 = vsub.f32 %v139, %v140
    %v142 = vand.u32 %v141, 4294901760
    %143 = vmatpush.msra.mxu0 %v142
    %v144 = vand.u32 %v24, 4294901760
    %v145 = vsub.f32 %v24, %v144
    %v146 = vand.u32 %v145, 4294901760
    %v147 = vsub.f32 %v145, %v146
    %v148 = vand.u32 %v147, 4294901760
    %149 = vmatpush.msra.mxu0 %v148
    %v150 = vand.u32 %v23, 4294901760
    %v151 = vsub.f32 %v23, %v150
    %v152 = vand.u32 %v151, 4294901760
    %v153 = vsub.f32 %v151, %v152
    %v154 = vand.u32 %v153, 4294901760
    %155 = vmatpush.msra.mxu0 %v154
    %v156 = vand.u32 %v22, 4294901760
    %v157 = vsub.f32 %v22, %v156
    %v158 = vand.u32 %v157, 4294901760
    %v159 = vsub.f32 %v157, %v158
    %v160 = vand.u32 %v159, 4294901760
    %161 = vmatpush.msra.mxu0 %v160
    %v162 = vand.u32 %v21, 4294901760
    %v163 = vsub.f32 %v21, %v162
    %v164 = vand.u32 %v163, 4294901760
    %v165 = vsub.f32 %v163, %v164
    %v166 = vand.u32 %v165, 4294901760
    %167 = vmatpush.msra.mxu0 %v166
    %v168 = vand.u32 %v20, 4294901760
    %v169 = vsub.f32 %v20, %v168
    %v170 = vand.u32 %v169, 4294901760
    %v171 = vsub.f32 %v169, %v170
    %v172 = vand.u32 %v171, 4294901760
    %173 = vmatpush.msra.mxu0 %v172
    %v174 = vand.u32 %v19, 4294901760
    %v175 = vsub.f32 %v19, %v174
    %v176 = vand.u32 %v175, 4294901760
    %v177 = vsub.f32 %v175, %v176
    %v178 = vand.u32 %v177, 4294901760
    %179 = vmatpush.msra.mxu0 %v178
    %v180 = vand.u32 %v17, 4294901760
    %181 = vmatmul.f32.gmra.mxu0 %v180
    %v182 = vpop.f32.mrf.mxu0
    %v183 = vadd.f32 %v74, %v182
    %v184 = vand.u32 %v18, 4294901760
    %185 = vmatmul.f32.gmra.mxu0 %v184
    %v186 = vpop.f32.mrf.mxu0
    %v187 = vadd.f32 %v82, %v186
    %188 = vdwg.mxu0
    %v189 = vand.u32 %v34, 4294901760
    %v190 = vsub.f32 %v34, %v189
    %191 = vmatpush.msra.mxu0 %v190
    %v192 = vand.u32 %v33, 4294901760
    %v193 = vsub.f32 %v33, %v192
    %194 = vmatpush.msra.mxu0 %v193
    %v195 = vand.u32 %v32, 4294901760
    %v196 = vsub.f32 %v32, %v195
    %197 = vmatpush.msra.mxu0 %v196
    %v198 = vand.u32 %v31, 4294901760
    %v199 = vsub.f32 %v31, %v198
    %200 = vmatpush.msra.mxu0 %v199
    %v201 = vand.u32 %v30, 4294901760
    %v202 = vsub.f32 %v30, %v201
    %203 = vmatpush.msra.mxu0 %v202
    %v204 = vand.u32 %v29, 4294901760
    %v205 = vsub.f32 %v29, %v204
    %206 = vmatpush.msra.mxu0 %v205
    %v207 = vand.u32 %v28, 4294901760
    %v208 = vsub.f32 %v28, %v207
    %209 = vmatpush.msra.mxu0 %v208
    %v210 = vand.u32 %v27, 4294901760
    %v211 = vsub.f32 %v27, %v210
    %212 = vmatpush.msra.mxu0 %v211
    %v213 = vand.u32 %v26, 4294901760
    %v214 = vsub.f32 %v26, %v213
    %215 = vmatpush.msra.mxu0 %v214
    %v216 = vand.u32 %v25, 4294901760
    %v217 = vsub.f32 %v25, %v216
    %218 = vmatpush.msra.mxu0 %v217
    %v219 = vand.u32 %v24, 4294901760
    %v220 = vsub.f32 %v24, %v219
    %221 = vmatpush.msra.mxu0 %v220
    %v222 = vand.u32 %v23, 4294901760
    %v223 = vsub.f32 %v23, %v222
    %224 = vmatpush.msra.mxu0 %v223
    %v225 = vand.u32 %v22, 4294901760
    %v226 = vsub.f32 %v22, %v225
    %227 = vmatpush.msra.mxu0 %v226
    %v228 = vand.u32 %v21, 4294901760
    %v229 = vsub.f32 %v21, %v228
    %230 = vmatpush.msra.mxu0 %v229
    %v231 = vand.u32 %v20, 4294901760
    %v232 = vsub.f32 %v20, %v231
    %233 = vmatpush.msra.mxu0 %v232
    %v234 = vand.u32 %v19, 4294901760
    %v235 = vsub.f32 %v19, %v234
    %236 = vmatpush.msra.mxu0 %v235
    %v237 = vand.u32 %v17, 4294901760
    %v238 = vsub.f32 %v17, %v237
    %239 = vmatmul.f32.gmra.mxu0 %v238
    %v240 = vpop.f32.mrf.mxu0
    %v241 = vadd.f32 %v183, %v240
    %v242 = vand.u32 %v18, 4294901760
    %v243 = vsub.f32 %v18, %v242
    %244 = vmatmul.f32.gmra.mxu0 %v243
    %v245 = vpop.f32.mrf.mxu0
    %v246 = vadd.f32 %v187, %v245
    %247 = vdwg.mxu0
    %v248 = vand.u32 %v34, 4294901760
    %249 = vmatpush.msra.mxu0 %v248
    %v250 = vand.u32 %v33, 4294901760
    %251 = vmatpush.msra.mxu0 %v250
    %v252 = vand.u32 %v32, 4294901760
    %253 = vmatpush.msra.mxu0 %v252
    %v254 = vand.u32 %v31, 4294901760
    %255 = vmatpush.msra.mxu0 %v254
    %v256 = vand.u32 %v30, 4294901760
    %257 = vmatpush.msra.mxu0 %v256
    %v258 = vand.u32 %v29, 4294901760
    %259 = vmatpush.msra.mxu0 %v258
    %v260 = vand.u32 %v28, 4294901760
    %261 = vmatpush.msra.mxu0 %v260
    %v262 = vand.u32 %v27, 4294901760
    %263 = vmatpush.msra.mxu0 %v262
    %v264 = vand.u32 %v26, 4294901760
    %265 = vmatpush.msra.mxu0 %v264
    %v266 = vand.u32 %v25, 4294901760
    %267 = vmatpush.msra.mxu0 %v266
    %v268 = vand.u32 %v24, 4294901760
    %269 = vmatpush.msra.mxu0 %v268
    %v270 = vand.u32 %v23, 4294901760
    %271 = vmatpush.msra.mxu0 %v270
    %v272 = vand.u32 %v22, 4294901760
    %273 = vmatpush.msra.mxu0 %v272
    %v274 = vand.u32 %v21, 4294901760
    %275 = vmatpush.msra.mxu0 %v274
    %v276 = vand.u32 %v20, 4294901760
    %277 = vmatpush.msra.mxu0 %v276
    %v278 = vand.u32 %v19, 4294901760
    %279 = vmatpush.msra.mxu0 %v278
    %v280 = vand.u32 %v17, 4294901760
    %v281 = vsub.f32 %v17, %v280
    %v282 = vand.u32 %v281, 4294901760
    %283 = vmatmul.f32.gmra.mxu0 %v282
    %v284 = vpop.f32.mrf.mxu0
    %v285 = vadd.f32 %v241, %v284
    %v286 = vand.u32 %v18, 4294901760
    %v287 = vsub.f32 %v18, %v286
    %v288 = vand.u32 %v287, 4294901760
    %289 = vmatmul.f32.gmra.mxu0 %v288
    %v290 = vpop.f32.mrf.mxu0
    %v291 = vadd.f32 %v246, %v290
    %292 = vdwg.mxu0
    %v293 = vand.u32 %v34, 4294901760
    %v294 = vsub.f32 %v34, %v293
    %v295 = vand.u32 %v294, 4294901760
    %296 = vmatpush.msra.mxu0 %v295
    %v297 = vand.u32 %v33, 4294901760
    %v298 = vsub.f32 %v33, %v297
    %v299 = vand.u32 %v298, 4294901760
    %300 = vmatpush.msra.mxu0 %v299
    %v301 = vand.u32 %v32, 4294901760
    %v302 = vsub.f32 %v32, %v301
    %v303 = vand.u32 %v302, 4294901760
    %304 = vmatpush.msra.mxu0 %v303
    %v305 = vand.u32 %v31, 4294901760
    %v306 = vsub.f32 %v31, %v305
    %v307 = vand.u32 %v306, 4294901760
    %308 = vmatpush.msra.mxu0 %v307
    %v309 = vand.u32 %v30, 4294901760
    %v310 = vsub.f32 %v30, %v309
    %v311 = vand.u32 %v310, 4294901760
    %312 = vmatpush.msra.mxu0 %v311
    %v313 = vand.u32 %v29, 4294901760
    %v314 = vsub.f32 %v29, %v313
    %v315 = vand.u32 %v314, 4294901760
    %316 = vmatpush.msra.mxu0 %v315
    %v317 = vand.u32 %v28, 4294901760
    %v318 = vsub.f32 %v28, %v317
    %v319 = vand.u32 %v318, 4294901760
    %320 = vmatpush.msra.mxu0 %v319
    %v321 = vand.u32 %v27, 4294901760
    %v322 = vsub.f32 %v27, %v321
    %v323 = vand.u32 %v322, 4294901760
    %324 = vmatpush.msra.mxu0 %v323
    %v325 = vand.u32 %v26, 4294901760
    %v326 = vsub.f32 %v26, %v325
    %v327 = vand.u32 %v326, 4294901760
    %328 = vmatpush.msra.mxu0 %v327
    %v329 = vand.u32 %v25, 4294901760
    %v330 = vsub.f32 %v25, %v329
    %v331 = vand.u32 %v330, 4294901760
    %332 = vmatpush.msra.mxu0 %v331
    %v333 = vand.u32 %v24, 4294901760
    %v334 = vsub.f32 %v24, %v333
    %v335 = vand.u32 %v334, 4294901760
    %336 = vmatpush.msra.mxu0 %v335
    %v337 = vand.u32 %v23, 4294901760
    %v338 = vsub.f32 %v23, %v337
    %v339 = vand.u32 %v338, 4294901760
    %340 = vmatpush.msra.mxu0 %v339
    %v341 = vand.u32 %v22, 4294901760
    %v342 = vsub.f32 %v22, %v341
    %v343 = vand.u32 %v342, 4294901760
    %344 = vmatpush.msra.mxu0 %v343
    %v345 = vand.u32 %v21, 4294901760
    %v346 = vsub.f32 %v21, %v345
    %v347 = vand.u32 %v346, 4294901760
    %348 = vmatpush.msra.mxu0 %v347
    %v349 = vand.u32 %v20, 4294901760
    %v350 = vsub.f32 %v20, %v349
    %v351 = vand.u32 %v350, 4294901760
    %352 = vmatpush.msra.mxu0 %v351
    %v353 = vand.u32 %v19, 4294901760
    %v354 = vsub.f32 %v19, %v353
    %v355 = vand.u32 %v354, 4294901760
    %356 = vmatpush.msra.mxu0 %v355
    %v357 = vand.u32 %v17, 4294901760
    %358 = vmatmul.f32.gmra.mxu0 %v357
    %v359 = vpop.f32.mrf.mxu0
    %v360 = vadd.f32 %v285, %v359
    %v361 = vand.u32 %v18, 4294901760
    %362 = vmatmul.f32.gmra.mxu0 %v361
    %v363 = vpop.f32.mrf.mxu0
    %v364 = vadd.f32 %v291, %v363
    %365 = vdwg.mxu0
    %v366 = vand.u32 %v34, 4294901760
    %367 = vmatpush.msra.mxu0 %v366
    %v368 = vand.u32 %v33, 4294901760
    %369 = vmatpush.msra.mxu0 %v368
    %v370 = vand.u32 %v32, 4294901760
    %371 = vmatpush.msra.mxu0 %v370
    %v372 = vand.u32 %v31, 4294901760
    %373 = vmatpush.msra.mxu0 %v372
    %v374 = vand.u32 %v30, 4294901760
    %375 = vmatpush.msra.mxu0 %v374
    %v376 = vand.u32 %v29, 4294901760
    %377 = vmatpush.msra.mxu0 %v376
    %v378 = vand.u32 %v28, 4294901760
    %379 = vmatpush.msra.mxu0 %v378
    %v380 = vand.u32 %v27, 4294901760
    %381 = vmatpush.msra.mxu0 %v380
    %v382 = vand.u32 %v26, 4294901760
    %383 = vmatpush.msra.mxu0 %v382
    %v384 = vand.u32 %v25, 4294901760
    %385 = vmatpush.msra.mxu0 %v384
    %v386 = vand.u32 %v24, 4294901760
    %387 = vmatpush.msra.mxu0 %v386
    %v388 = vand.u32 %v23, 4294901760
    %389 = vmatpush.msra.mxu0 %v388
    %v390 = vand.u32 %v22, 4294901760
    %391 = vmatpush.msra.mxu0 %v390
    %v392 = vand.u32 %v21, 4294901760
    %393 = vmatpush.msra.mxu0 %v392
    %v394 = vand.u32 %v20, 4294901760
    %395 = vmatpush.msra.mxu0 %v394
    %v396 = vand.u32 %v19, 4294901760
    %397 = vmatpush.msra.mxu0 %v396
    %v398 = vand.u32 %v17, 4294901760
    %399 = vmatmul.f32.gmra.mxu0 %v398
    %v400 = vpop.f32.mrf.mxu0
    %v401 = vadd.f32 %v360, %v400
    %v402 = vand.u32 %v18, 4294901760
    %403 = vmatmul.f32.gmra.mxu0 %v402
    %v404 = vpop.f32.mrf.mxu0
    %v405 = vadd.f32 %v364, %v404
    %406 = vdwg.mxu0
    %v407 = vmax.f32 %v401, 1e-12
    %v408 = vmax.f32 %v405, 1e-12
    %v409 = vrcp.pop %v407
    %v410 = vmul.f32 %v407, %v409
    %v411 = vsub.f32 1.0, %v410
    %v412 = vmul.f32 %v409, %v411
    %v413 = vadd.f32 %v409, %v412
    %vm414 = vweird.f32 %v407
    %vm415 = vweird.f32 %v409
    %vm416 = vmor %vm414, %vm415
    %v417 = vsel %vm416, %v409, %v413
    %v418 = vand.u32 2147483647, %v407
    %vm419 = vcmp.eq.f32.partialorder %v418, 8.507059e+37
    %v420 = vand.u32 %v407, 2147483648
    %v421 = vor.u32 1.1754944e-38, %v420
    %v422 = vsel %vm419, %v421, %v417
    %v423 = vmul.f32 1.0, %v422
    %v424 = vrcp.pop %v408
    %v425 = vmul.f32 %v408, %v424
    %v426 = vsub.f32 1.0, %v425
    %v427 = vmul.f32 %v424, %v426
    %v428 = vadd.f32 %v424, %v427
    %vm429 = vweird.f32 %v408
    %vm430 = vweird.f32 %v424
    %vm431 = vmor %vm429, %vm430
    %v432 = vsel %vm431, %v424, %v428
    %v433 = vand.u32 2147483647, %v408
    %vm434 = vcmp.eq.f32.partialorder %v433, 8.507059e+37
    %v435 = vand.u32 %v408, 2147483648
    %v436 = vor.u32 1.1754944e-38, %v435
    %v437 = vsel %vm434, %v436, %v432
    %v438 = vmul.f32 1.0, %v437
    %v439 = vld [vmem:[%s2] sm:$0xff]
    %vm440 = vcmask 64512
    %v442 = vsel %vm440, %v423, 0
    %v445 = vsel %vm440, %v438, 0
    %447 = vmatpush.msra.mxu0 0.0
    %448 = vmatpush.msra.mxu0 0.0
    %449 = vmatpush.msra.mxu0 0.0
    %450 = vmatpush.msra.mxu0 0.0
    %451 = vmatpush.msra.mxu0 0.0
    %452 = vmatpush.msra.mxu0 0.0
    %453 = vmatpush.msra.mxu0 0.0
    %454 = vmatpush.msra.mxu0 0.0
    %455 = vmatpush.msra.mxu0 0.0
    %456 = vmatpush.msra.mxu0 0.0
    %457 = vmatpush.msra.mxu0 0.0
    %458 = vmatpush.msra.mxu0 0.0
    %459 = vmatpush.msra.mxu0 0.0
    %460 = vmatpush.msra.mxu0 0.0
    %461 = vmatpush.msra.mxu0 0.0
    %v462 = vand.u32 %v439, 4294901760
    %463 = vmatpush.msra.mxu0 %v462
    %v464 = vand.u32 %v442, 4294901760
    %v465 = vsub.f32 %v442, %v464
    %v466 = vand.u32 %v465, 4294901760
    %v467 = vsub.f32 %v465, %v466
    %v468 = vand.u32 %v467, 4294901760
    %469 = vmatmul.f32.gmra.mxu0 %v468
    %v470 = vpop.f32.mrf.mxu0
    %v471 = vadd.f32 0.0, %v470
    %v472 = vand.u32 %v445, 4294901760
    %v473 = vsub.f32 %v445, %v472
    %v474 = vand.u32 %v473, 4294901760
    %v475 = vsub.f32 %v473, %v474
    %v476 = vand.u32 %v475, 4294901760
    %477 = vmatmul.f32.gmra.mxu0 %v476
    %v478 = vpop.f32.mrf.mxu0
    %v479 = vadd.f32 0.0, %v478
    %480 = vdwg.mxu0
    %481 = vmatpush.msra.mxu0 0.0
    %482 = vmatpush.msra.mxu0 0.0
    %483 = vmatpush.msra.mxu0 0.0
    %484 = vmatpush.msra.mxu0 0.0
    %485 = vmatpush.msra.mxu0 0.0
    %486 = vmatpush.msra.mxu0 0.0
    %487 = vmatpush.msra.mxu0 0.0
    %488 = vmatpush.msra.mxu0 0.0
    %489 = vmatpush.msra.mxu0 0.0
    %490 = vmatpush.msra.mxu0 0.0
    %491 = vmatpush.msra.mxu0 0.0
    %492 = vmatpush.msra.mxu0 0.0
    %493 = vmatpush.msra.mxu0 0.0
    %494 = vmatpush.msra.mxu0 0.0
    %495 = vmatpush.msra.mxu0 0.0
    %v496 = vand.u32 %v439, 4294901760
    %v497 = vsub.f32 %v439, %v496
    %v498 = vand.u32 %v497, 4294901760
    %v499 = vsub.f32 %v497, %v498
    %v500 = vand.u32 %v499, 4294901760
    %501 = vmatpush.msra.mxu0 %v500
    %v502 = vand.u32 %v442, 4294901760
    %503 = vmatmul.f32.gmra.mxu0 %v502
    %v504 = vpop.f32.mrf.mxu0
    %v505 = vadd.f32 %v471, %v504
    %v506 = vand.u32 %v445, 4294901760
    %507 = vmatmul.f32.gmra.mxu0 %v506
    %v508 = vpop.f32.mrf.mxu0
    %v509 = vadd.f32 %v479, %v508
    %510 = vdwg.mxu0
    %511 = vmatpush.msra.mxu0 0.0
    %512 = vmatpush.msra.mxu0 0.0
    %513 = vmatpush.msra.mxu0 0.0
    %514 = vmatpush.msra.mxu0 0.0
    %515 = vmatpush.msra.mxu0 0.0
    %516 = vmatpush.msra.mxu0 0.0
    %517 = vmatpush.msra.mxu0 0.0
    %518 = vmatpush.msra.mxu0 0.0
    %519 = vmatpush.msra.mxu0 0.0
    %520 = vmatpush.msra.mxu0 0.0
    %521 = vmatpush.msra.mxu0 0.0
    %522 = vmatpush.msra.mxu0 0.0
    %523 = vmatpush.msra.mxu0 0.0
    %524 = vmatpush.msra.mxu0 0.0
    %525 = vmatpush.msra.mxu0 0.0
    %v526 = vand.u32 %v439, 4294901760
    %v527 = vsub.f32 %v439, %v526
    %528 = vmatpush.msra.mxu0 %v527
    %v529 = vand.u32 %v442, 4294901760
    %v530 = vsub.f32 %v442, %v529
    %531 = vmatmul.f32.gmra.mxu0 %v530
    %v532 = vpop.f32.mrf.mxu0
    %v533 = vadd.f32 %v505, %v532
    %v534 = vand.u32 %v445, 4294901760
    %v535 = vsub.f32 %v445, %v534
    %536 = vmatmul.f32.gmra.mxu0 %v535
    %v537 = vpop.f32.mrf.mxu0
    %v538 = vadd.f32 %v509, %v537
    %539 = vdwg.mxu0
    %540 = vmatpush.msra.mxu0 0.0
    %541 = vmatpush.msra.mxu0 0.0
    %542 = vmatpush.msra.mxu0 0.0
    %543 = vmatpush.msra.mxu0 0.0
    %544 = vmatpush.msra.mxu0 0.0
    %545 = vmatpush.msra.mxu0 0.0
    %546 = vmatpush.msra.mxu0 0.0
    %547 = vmatpush.msra.mxu0 0.0
    %548 = vmatpush.msra.mxu0 0.0
    %549 = vmatpush.msra.mxu0 0.0
    %550 = vmatpush.msra.mxu0 0.0
    %551 = vmatpush.msra.mxu0 0.0
    %552 = vmatpush.msra.mxu0 0.0
    %553 = vmatpush.msra.mxu0 0.0
    %554 = vmatpush.msra.mxu0 0.0
    %v555 = vand.u32 %v439, 4294901760
    %556 = vmatpush.msra.mxu0 %v555
    %v557 = vand.u32 %v442, 4294901760
    %v558 = vsub.f32 %v442, %v557
    %v559 = vand.u32 %v558, 4294901760
    %560 = vmatmul.f32.gmra.mxu0 %v559
    %v561 = vpop.f32.mrf.mxu0
    %v562 = vadd.f32 %v533, %v561
    %v563 = vand.u32 %v445, 4294901760
    %v564 = vsub.f32 %v445, %v563
    %v565 = vand.u32 %v564, 4294901760
    %566 = vmatmul.f32.gmra.mxu0 %v565
    %v567 = vpop.f32.mrf.mxu0
    %v568 = vadd.f32 %v538, %v567
    %569 = vdwg.mxu0
    %570 = vmatpush.msra.mxu0 0.0
    %571 = vmatpush.msra.mxu0 0.0
    %572 = vmatpush.msra.mxu0 0.0
    %573 = vmatpush.msra.mxu0 0.0
    %574 = vmatpush.msra.mxu0 0.0
    %575 = vmatpush.msra.mxu0 0.0
    %576 = vmatpush.msra.mxu0 0.0
    %577 = vmatpush.msra.mxu0 0.0
    %578 = vmatpush.msra.mxu0 0.0
    %579 = vmatpush.msra.mxu0 0.0
    %580 = vmatpush.msra.mxu0 0.0
    %581 = vmatpush.msra.mxu0 0.0
    %582 = vmatpush.msra.mxu0 0.0
    %583 = vmatpush.msra.mxu0 0.0
    %584 = vmatpush.msra.mxu0 0.0
    %v585 = vand.u32 %v439, 4294901760
    %v586 = vsub.f32 %v439, %v585
    %v587 = vand.u32 %v586, 4294901760
    %588 = vmatpush.msra.mxu0 %v587
    %v589 = vand.u32 %v442, 4294901760
    %590 = vmatmul.f32.gmra.mxu0 %v589
    %v591 = vpop.f32.mrf.mxu0
    %v592 = vadd.f32 %v562, %v591
    %v593 = vand.u32 %v445, 4294901760
    %594 = vmatmul.f32.gmra.mxu0 %v593
    %v595 = vpop.f32.mrf.mxu0
    %v596 = vadd.f32 %v568, %v595
    %597 = vdwg.mxu0
    %598 = vmatpush.msra.mxu0 0.0
    %599 = vmatpush.msra.mxu0 0.0
    %600 = vmatpush.msra.mxu0 0.0
    %601 = vmatpush.msra.mxu0 0.0
    %602 = vmatpush.msra.mxu0 0.0
    %603 = vmatpush.msra.mxu0 0.0
    %604 = vmatpush.msra.mxu0 0.0
    %605 = vmatpush.msra.mxu0 0.0
    %606 = vmatpush.msra.mxu0 0.0
    %607 = vmatpush.msra.mxu0 0.0
    %608 = vmatpush.msra.mxu0 0.0
    %609 = vmatpush.msra.mxu0 0.0
    %610 = vmatpush.msra.mxu0 0.0
    %611 = vmatpush.msra.mxu0 0.0
    %612 = vmatpush.msra.mxu0 0.0
    %v613 = vand.u32 %v439, 4294901760
    %614 = vmatpush.msra.mxu0 %v613
    %v615 = vand.u32 %v442, 4294901760
    %616 = vmatmul.f32.gmra.mxu0 %v615
    %v617 = vpop.f32.mrf.mxu0
    %v618 = vadd.f32 %v592, %v617
    %v619 = vand.u32 %v445, 4294901760
    %620 = vmatmul.f32.gmra.mxu0 %v619
    %v621 = vpop.f32.mrf.mxu0
    %v622 = vadd.f32 %v596, %v621
    %623 = vdwg.mxu0
    %v624 = vmul.f32 %v17, %v618
    %v625 = vmul.f32 %v18, %v622
    %626 = vst [vmem:[#allocation2] sm:$0xff] %v624
    %627 = vst [vmem:[#allocation2 + $0x8] sm:$0xff] %v625
    // Predicated region
    $region14: #{tpu_custom_call.1} parent=1 // pred_check
      _
    $region15: #{tpu_custom_call.1} parent=1 // pred_check_branch
      %629 = sbr.rel (0) target = $region17
    $region16: #{tpu_custom_call.1} parent=1 // pred_region
      %631 = vsyncadd [#allocation3], 0
      %s632 = sshll.u32 [#allocation2], 4
      %s633 = int_to_ptr.vmem [resolvable:$true] %s632
      %s634 = sshll.u32 %s3, 4
      %s635 = int_to_ptr.hbm [resolvable:$true] %s634
      %640 = dma.vmem_to_hbm [thread:$0]  %s633, 256, %s635, [#allocation3], 128, 128, 8
    $region17: #{tpu_custom_call.1} parent=1 // pred_fallthru
      _
    // Predicated region
    $region18: #{tpu_custom_call.1} parent=1 // pred_check
      _
    $region19: #{tpu_custom_call.1} parent=1 // pred_check_branch
      %642 = sbr.rel (0) target = $region21
    $region20: #{tpu_custom_call.1} parent=1 // pred_region
      %644 = dma.done [#allocation3], 256
    $region21: #{tpu_custom_call.1} parent=1 // pred_fallthru
      _
    %645 = vsyncpa [#allocation3], 1

</llo_original>
